<compile_context>
chip_gen: v6e
topology: v6e:2x2x1
jax: 0.10.0
libtpu: 0.0.40
codegen_flags: <defaults>
</compile_context>

<pallas_src>
import functools

import jax
import jax.numpy as jnp
from jax import lax
from jax.experimental import pallas as pl
from jax.experimental.pallas import tpu as pltpu

CLASSES = 18
EPSILON = 1e-7


def _f1_partial_kernel(pred_ref, tgt_ref, out_ref, *, n_rows, tile_cols, n_classes):
    """One batch tile: pred_ref (C, TN) logits, tgt_ref (1, TN) int32 labels.

    Writes one packed (1, 3, C) partial: [tp, sum_softmax, class_count].
    """
    i = pl.program_id(0)

    def compute(mask_tail):
        pred = pred_ref[...].astype(jnp.float32)               # (C, TN)
        tgt = tgt_ref[...]                                     # (1, TN) int32

        if mask_tail:
            lane = lax.broadcasted_iota(jnp.int32, (1, tile_cols), 1) + i * tile_cols
            valid = lane < n_rows                              # (1, TN) bool
            validf = valid.astype(jnp.float32)                 # (1, TN)
            # Zero garbage lanes BEFORE exp so OOB tail data can never make inf/nan.
            pred = jnp.where(valid, pred, 0.0)

        # Row-wise softmax over the class (sublane) axis, in f32.
        m = jnp.max(pred, axis=0, keepdims=True)               # (1, TN)
        e = jnp.exp(pred - m)                                  # (C, TN)
        denom = jnp.sum(e, axis=0, keepdims=True)              # (1, TN)
        p = e * pl.reciprocal(denom, approx=True)              # (C, TN), EUP recip

        # One-hot compare via class iota (no extra tensors materialized).
        cls = lax.broadcasted_iota(jnp.int32, (n_classes, tile_cols), 0)
        onehot = (cls == tgt).astype(jnp.float32)              # (C, TN)

        if mask_tail:
            p = p * validf
            onehot = onehot * validf

        # Per-class partial sums over the batch (lane) axis -- VPU + one lane reduce.
        tp = jnp.sum(p * onehot, axis=1)                       # (C,)
        sp = jnp.sum(p, axis=1)                                # (C,)  = tp + fp
        cnt = jnp.sum(onehot, axis=1)                          # (C,)  = tp + fn

        # Single packed block write -> one output DMA per grid step.
        out_ref[...] = jnp.concatenate(
            [tp.reshape(1, 1, n_classes),
             sp.reshape(1, 1, n_classes),
             cnt.reshape(1, 1, n_classes)], axis=1)

    if n_rows % tile_cols == 0:
        # No partial tail tile exists: never emit the masking code (static).
        compute(mask_tail=False)
    else:
        last = pl.num_programs(0) - 1

        @pl.when(i != last)
        def _():
            compute(mask_tail=False)

        @pl.when(i == last)
        def _():
            compute(mask_tail=True)


def f1_loss_pallas(y_pred, y_true, *, classes=CLASSES, epsilon=EPSILON,
                   block_cols=8192):
    """y_pred: (N, C) float logits, y_true: (N,) int class ids -> scalar f32 loss."""
    n, c = y_pred.shape
    assert c == classes
    assert y_true.ndim == 1 and y_true.shape[0] == n

    # Lane-dense layout: class axis on sublanes, batch on lanes.
    pred_t = jnp.transpose(y_pred)                    # (C, N)
    tgt = y_true.astype(jnp.int32).reshape(1, n)      # (1, N)

    if n <= block_cols:
        tn = n                                        # single tile == full array
    else:
        tn = max(128, (block_cols // 128) * 128)      # lane tile, multiple of 128
    num_tiles = pl.cdiv(n, tn)

    kernel = functools.partial(_f1_partial_kernel,
                               n_rows=n, tile_cols=tn, n_classes=c)

    parts = pl.pallas_call(
        kernel,
        out_shape=jax.ShapeDtypeStruct((num_tiles, 3, c), jnp.float32),
        grid_spec=pltpu.PrefetchScalarGridSpec(
            num_scalar_prefetch=0,
            grid=(num_tiles,),
            in_specs=[
                pl.BlockSpec((c, tn), lambda i: (0, i)),   # logits (C, tn)
                pl.BlockSpec((1, tn), lambda i: (0, i)),   # labels (1, tn)
            ],
            out_specs=pl.BlockSpec((1, 3, c), lambda i: (i, 0, 0)),
        ),
        compiler_params=pltpu.CompilerParams(
            dimension_semantics=("parallel",)),        # independent tiles -> megacore
    )(pred_t, tgt)

    # Tiny final reduction + F1 arithmetic (3 x 18) in plain JAX.
    total = jnp.sum(parts, axis=0)                     # (3, C)
    tp, sum_p, count = total[0], total[1], total[2]

    precision = tp / (sum_p + epsilon)                 # sum_p = tp + fp
    recall = tp / (count + epsilon)                    # count = tp + fn
    f1 = 2.0 * precision * recall / (precision + recall + epsilon)
    f1 = jnp.clip(f1, epsilon, 1.0 - epsilon)
    return 1.0 - jnp.mean(f1)


def _reference(y_pred, y_true, classes=CLASSES, epsilon=EPSILON):
    y_true_oh = jax.nn.one_hot(y_true, classes, dtype=jnp.float32)
    p = jax.nn.softmax(y_pred.astype(jnp.float32), axis=1)
    tp = jnp.sum(y_true_oh * p, axis=0)
    fp = jnp.sum((1.0 - y_true_oh) * p, axis=0)
    fn = jnp.sum(y_true_oh * (1.0 - p), axis=0)
    precision = tp / (tp + fp + epsilon)
    recall = tp / (tp + fn + epsilon)
    f1 = 2.0 * precision * recall / (precision + recall + epsilon)
    f1 = jnp.clip(f1, epsilon, 1.0 - epsilon)
    return 1.0 - jnp.mean(f1)


if __name__ == "__main__":
    key = jax.random.PRNGKey(0)
    k1, k2, k3, k4, k5, k6 = jax.random.split(key, 6)

    # 1) Small aligned batch (single tile, unmasked fast path).
    n1 = 64
    pred1 = jax.random.normal(k1, (n1, CLASSES), dtype=jnp.float32) * 3.0
    tgt1 = jax.random.randint(k2, (n1,), 0, CLASSES, dtype=jnp.int32)
    loss1 = f1_loss_pallas(pred1, tgt1)
    jax.block_until_ready(loss1)
    ref1 = _reference(pred1, tgt1)
    assert jnp.allclose(loss1, ref1, atol=2e-3, rtol=2e-3), (loss1, ref1)

    # 2) Multi-tile batch with a partial tail tile (exercises the masked path).
    n2 = 300
    pred2 = jax.random.normal(k3, (n2, CLASSES), dtype=jnp.float32)
    tgt2 = jax.random.randint(k4, (n2,), 0, CLASSES, dtype=jnp.int32)
    loss2 = f1_loss_pallas(pred2, tgt2, block_cols=256)
    jax.block_until_ready(loss2)
    ref2 = _reference(pred2, tgt2)
    assert jnp.allclose(loss2, ref2, atol=2e-3, rtol=2e-3), (loss2, ref2)

    # 3) bf16 logits, odd batch (halves HBM traffic; f32 accumulation in-kernel).
    n3 = 19
    pred3 = jax.random.normal(k5, (n3, CLASSES), dtype=jnp.float32).astype(jnp.bfloat16)
    tgt3 = jax.random.randint(k6, (n3,), 0, CLASSES, dtype=jnp.int32)
    loss3 = f1_loss_pallas(pred3, tgt3)
    jax.block_until_ready(loss3)
    ref3 = _reference(pred3, tgt3)
    assert jnp.allclose(loss3, ref3, atol=2e-3, rtol=2e-3), (loss3, ref3)

    print("KERNEL_OK")
</pallas_src>

<mosaic_0001>
module attributes {stable_mosaic.version = 11 : i64} {
  func.func @_f1_partial_kernel(%arg0: i32, %arg1: memref<18x64xf32, #tpu.memory_space<vmem>>, %arg2: memref<1x64xi32, #tpu.memory_space<vmem>>, %arg3: memref<1x3x18xf32, #tpu.memory_space<vmem>>) attributes {dimension_semantics = [#tpu.dimension_semantics<parallel>], iteration_bounds = array<i64: 1>, scalar_prefetch = 0 : i64, scratch_operands = 0 : i64, tpu.core_type = #tpu.core_type<tc>, window_params = [{transform_indices = @transform_0, window_bounds = array<i64: 18, 64>}, {transform_indices = @transform_1, window_bounds = array<i64: 1, 64>}, {transform_indices = @transform_2, window_bounds = array<i64: 1, 3, 18>}]} {
    %c0 = arith.constant 0 : index
    %c0_0 = arith.constant 0 : index
    %0 = vector.load %arg1[%c0, %c0_0] : memref<18x64xf32, #tpu.memory_space<vmem>>, vector<18x64xf32>
    %c0_1 = arith.constant 0 : index
    %c0_2 = arith.constant 0 : index
    %1 = vector.load %arg2[%c0_1, %c0_2] : memref<1x64xi32, #tpu.memory_space<vmem>>, vector<1x64xi32>
    %cst = arith.constant dense<0xFF800000> : vector<64xf32>
    %2 = vector.multi_reduction <maximumf>, %0, %cst [0] : vector<18x64xf32> to vector<64xf32>
    %3 = vector.shape_cast %2 : vector<64xf32> to vector<1x64xf32>
    %4 = vector.broadcast %3 : vector<1x64xf32> to vector<18x64xf32>
    %5 = arith.subf %0, %4 : vector<18x64xf32>
    %6 = math.exp %5 : vector<18x64xf32>
    %cst_3 = arith.constant dense<0.000000e+00> : vector<64xf32>
    %7 = vector.multi_reduction <add>, %6, %cst_3 [0] : vector<18x64xf32> to vector<64xf32>
    %8 = vector.shape_cast %7 : vector<64xf32> to vector<1x64xf32>
    %9 = tpu.reciprocal %8 {approx = true} : vector<1x64xf32> -> vector<1x64xf32>
    %10 = vector.broadcast %9 : vector<1x64xf32> to vector<18x64xf32>
    %11 = arith.mulf %6, %10 : vector<18x64xf32>
    %12 = tpu.iota {dimensions = array<i32: 0>} : vector<18x64xi32>
    %13 = vector.broadcast %1 : vector<1x64xi32> to vector<18x64xi32>
    %14 = arith.cmpi eq, %12, %13 : vector<18x64xi32>
    %15 = arith.extui %14 : vector<18x64xi1> to vector<18x64xi32>
    %16 = arith.sitofp %15 : vector<18x64xi32> to vector<18x64xf32>
    %17 = arith.mulf %11, %16 : vector<18x64xf32>
    %cst_4 = arith.constant dense<0.000000e+00> : vector<18xf32>
    %18 = vector.multi_reduction <add>, %17, %cst_4 [1] : vector<18x64xf32> to vector<18xf32>
    %cst_5 = arith.constant dense<0.000000e+00> : vector<18xf32>
    %19 = vector.multi_reduction <add>, %11, %cst_5 [1] : vector<18x64xf32> to vector<18xf32>
    %cst_6 = arith.constant dense<0.000000e+00> : vector<18xf32>
    %20 = vector.multi_reduction <add>, %16, %cst_6 [1] : vector<18x64xf32> to vector<18xf32>
    %21 = vector.shape_cast %18 : vector<18xf32> to vector<1x1x18xf32>
    %22 = vector.shape_cast %19 : vector<18xf32> to vector<1x1x18xf32>
    %23 = vector.shape_cast %20 : vector<18xf32> to vector<1x1x18xf32>
    %24 = tpu.concatenate %21, %22, %23 in 1 : vector<1x1x18xf32>, vector<1x1x18xf32>, vector<1x1x18xf32> -> vector<1x3x18xf32>
    %c0_7 = arith.constant 0 : index
    %c0_8 = arith.constant 0 : index
    %c0_9 = arith.constant 0 : index
    %25 = vector.load %arg3[%c0_7, %c0_8, %c0_9] : memref<1x3x18xf32, #tpu.memory_space<vmem>>, vector<1x3x18xf32>
    tpu.vector_store %arg3[%c0_7, %c0_8, %c0_9], %24 {strides = array<i32>} : memref<1x3x18xf32, #tpu.memory_space<vmem>>, vector<1x3x18xf32>,
    return
  }
  func.func @transform_0(%arg0: i32) -> (i32, i32) {
    %c0_i32 = arith.constant 0 : i32
    %c0_i32_0 = arith.constant 0 : i32
    return %c0_i32, %arg0 : i32, i32
  }
  func.func @transform_1(%arg0: i32) -> (i32, i32) {
    %c0_i32 = arith.constant 0 : i32
    %c0_i32_0 = arith.constant 0 : i32
    return %c0_i32, %arg0 : i32, i32
  }
  func.func @transform_2(%arg0: i32) -> (i32, i32, i32) {
    %c0_i32 = arith.constant 0 : i32
    %c0_i32_0 = arith.constant 0 : i32
    %c0_i32_1 = arith.constant 0 : i32
    return %arg0, %c0_i32, %c0_i32_0 : i32, i32, i32
  }
}

</mosaic_0001>

<llo_original>
// kernel: tpu_custom_call.1
$region0: #{tpu_custom_call.1}
  #allocation0 [shape = 'u32[]', space=smem, size = 0x4, offset = 0x4, fixed_abs, tag = 'smem constant byte address 0x4 - core index']
  #allocation1 [shape = 'u32[144,128]{1,0:T(1,128)}', space=vmem, size = 0x12000, scoped, tag = 'internal scratch']
  %s0 = inlined_call_operand.hbm [shape: f32[18,64], index: 0, kind: input, shape index: {}]
  %s1 = inlined_call_operand.vmem [shape: s32[1,64], index: 1, kind: input, shape index: {}]
  %s2 = inlined_call_operand.vmem [shape: f32[1,3,18], index: 2, kind: output, shape index: {}]
  %s3 = sld [smem:[#allocation0]]
  $region22: #{tpu_custom_call.1} parent=0
    _
  %s5 = ssub.s32 1, %s3
  %s6 = scalar_select 0, %s5, %s3
  $region1: #{tpu_custom_call.1} parent=0
    #allocation2 [shape = 'u8[12288]{0}', space=vmem, size = 0x3000, scoped, tag = 'input window, operand 0, single buffered']
    #allocation3 [shape = 's32[1]{0}', space=sflag, size = 0x4, scoped, tag = 'scoped memory for tpu_custom_call.1']
    %7 = vsyncpa [#allocation3], 0
    // Predicated region
    $region2: #{tpu_custom_call.1} parent=1 // pred_check
      _
    $region3: #{tpu_custom_call.1} parent=1 // pred_check_branch
      %9 = sbr.rel (0) target = $region5
    $region4: #{tpu_custom_call.1} parent=1 // pred_region
      %s11 = ssub.s32 384, 384
      %12 = vsyncadd [#allocation3], %s11
      %s13 = sshll.u32 [#allocation2], 4
      %s14 = int_to_ptr.vmem [resolvable:$true] %s13
      %19 = dma.hbm_to_vmem [thread:$0]  %s0, 384, %s14, [#allocation3], 128, 128, 8
    $region5: #{tpu_custom_call.1} parent=1 // pred_fallthru
      _
    // Predicated region
    $region6: #{tpu_custom_call.1} parent=1 // pred_check
      _
    $region7: #{tpu_custom_call.1} parent=1 // pred_check_branch
      %21 = sbr.rel (0) target = $region9
    $region8: #{tpu_custom_call.1} parent=1 // pred_region
      _
    $region9: #{tpu_custom_call.1} parent=1 // pred_fallthru
      _
    // Predicated region
    $region10: #{tpu_custom_call.1} parent=1 // pred_check
      _
    $region11: #{tpu_custom_call.1} parent=1 // pred_check_branch
      %23 = sbr.rel (0) target = $region13
    $region12: #{tpu_custom_call.1} parent=1 // pred_region
      %24 = dma.done [#allocation3], 384
    $region13: #{tpu_custom_call.1} parent=1 // pred_fallthru
      _
    %v25 = vld [vmem:[#allocation2] sm:$0xff]
    %v26 = vld [vmem:[#allocation2 + $0x8] sm:$0xff]
    %v27 = vld [vmem:[#allocation2 + $0x10] sm:$0x3]
    %v28 = vld [vmem:[%s1] sm:$0x1]
    %vm29 = vcmask 523264
    %v30 = vsel %vm29, %v25, -inf
    %v31 = vsel %vm29, %v26, -inf
    %vm32 = vcmask 517120
    %v33 = vsel %vm32, %v27, -inf
    %v34 = vmax.f32 %v30, %v31
    %v35 = vmax.f32 %v34, %v33
    %v36 = vrot.slane %v35, 4
    %v37 = vmax.f32 %v35, %v36
    %v38 = vrot.slane %v37, 2
    %v39 = vmax.f32 %v37, %v38
    %v40 = vrot.slane %v39, 1
    %v41 = vmax.f32 %v39, %v40
    %v42 = vsub.f32 %v25, %v41
    %v43 = vsub.f32 %v26, %v41
    %v44 = vsub.f32 %v27, %v41
    %v45 = vmul.f32 %v42, 1.442695
    %v46 = vpow.pop %v45
    %v47 = vmul.f32 %v43, 1.442695
    %v48 = vpow.pop %v47
    %v49 = vmul.f32 %v44, 1.442695
    %v50 = vpow.pop %v49
    %v51 = vsel %vm29, %v46, 0.0
    %v52 = vsel %vm29, %v48, 0.0
    %v53 = vadd.f32 %v51, %v52
    %v54 = vsel %vm32, %v50, 0.0
    %v55 = vadd.f32 %v53, %v54
    %v56 = vrot.slane %v55, 4
    %v57 = vadd.f32 %v55, %v56
    %v58 = vrot.slane %v57, 2
    %v59 = vadd.f32 %v57, %v58
    %v60 = vrot.slane %v59, 1
    %v61 = vadd.f32 %v59, %v60
    %v62 = vrcp.pop %v61
    %v63 = vmul.f32 %v46, %v62
    %v64 = vmul.f32 %v48, %v62
    %v65 = vmul.f32 %v50, %v62
    %v66 = vlaneseq
    %v67 = vshrl.u32 %v66, 7
    %v68 = vadd.s32 %v67, 8
    %v69 = vadd.s32 %v67, 16
    %v70 = vlaneseq
    %v71 = vshrl.u32 %v70, 7
    %v72 = vsub.s32 0, %v71
    %v73 = vrot.slane %v28, %v72
    %vm74 = vcmp.eq.s32.totalorder %v67, %v73
    %vm75 = vcmp.eq.s32.totalorder %v68, %v73
    %vm76 = vcmp.eq.s32.totalorder %v69, %v73
    %v77 = vsel %vm74, 1, 0
    %v78 = vsel %vm75, 1, 0
    %v79 = vsel %vm76, 1, 0
    %v80 = vcvt.s32.f32 %v77
    %v81 = vcvt.s32.f32 %v78
    %v82 = vcvt.s32.f32 %v79
    %v83 = vmul.f32 %v63, %v80
    %v84 = vmul.f32 %v64, %v81
    %v85 = vmul.f32 %v65, %v82
    %v86 = vsel %vm29, %v83, 0.0
    %87 = vadd.xlane.f32.xlu0 %v86
    %v88 = vpop.xlane.xlu0 %87
    %v89 = vsel %vm29, %v84, 0.0
    %90 = vadd.xlane.f32.xlu0 %v89
    %v91 = vpop.xlane.xlu0 %90
    %v92 = vsel %vm32, %v85, 0.0
    %93 = vadd.xlane.f32.xlu0 %v92
    %v94 = vpop.xlane.xlu0 %93
    %v95 = vsel %vm29, %v63, 0.0
    %96 = vadd.xlane.f32.xlu0 %v95
    %v97 = vpop.xlane.xlu0 %96
    %v98 = vsel %vm29, %v64, 0.0
    %99 = vadd.xlane.f32.xlu0 %v98
    %v100 = vpop.xlane.xlu0 %99
    %v101 = vsel %vm32, %v65, 0.0
    %102 = vadd.xlane.f32.xlu0 %v101
    %v103 = vpop.xlane.xlu0 %102
    %v104 = vsel %vm29, %v80, 0.0
    %105 = vadd.xlane.f32.xlu0 %v104
    %v106 = vpop.xlane.xlu0 %105
    %v107 = vsel %vm29, %v81, 0.0
    %108 = vadd.xlane.f32.xlu0 %v107
    %v109 = vpop.xlane.xlu0 %108
    %v110 = vsel %vm32, %v82, 0.0
    %111 = vadd.xlane.f32.xlu0 %v110
    %v112 = vpop.xlane.xlu0 %111
    %v116 = vlaneseq
    %v117 = vand.u32 %v116, 127
    %v118 = vlaneseq
    %v119 = vshrl.u32 %v118, 7
    %v120 = vsub.s32 %v117, %v119
    %v121 = vrot.slane %v88, %v120
    %v122 = vadd.s32 %v117, 4294967288
    %v123 = vlaneseq
    %v124 = vshrl.u32 %v123, 7
    %v125 = vsub.s32 %v122, %v124
    %v126 = vrot.slane %v91, %v125
    %vm127 = vcmask 130112
    %v128 = vsel %vm127, %v126, %v121
    %v129 = vadd.s32 %v117, 4294967280
    %v130 = vlaneseq
    %v131 = vshrl.u32 %v130, 7
    %v132 = vsub.s32 %v129, %v131
    %v133 = vrot.slane %v94, %v132
    %vm134 = vcmask 195712
    %v135 = vsel %vm134, %v133, %v128
    %v140 = vlaneseq
    %v141 = vshrl.u32 %v140, 7
    %v142 = vsub.s32 %v117, %v141
    %v143 = vrot.slane %v97, %v142
    %v144 = vlaneseq
    %v145 = vshrl.u32 %v144, 7
    %v146 = vsub.s32 %v122, %v145
    %v147 = vrot.slane %v100, %v146
    %v148 = vsel %vm127, %v147, %v143
    %v149 = vlaneseq
    %v150 = vshrl.u32 %v149, 7
    %v151 = vsub.s32 %v129, %v150
    %v152 = vrot.slane %v103, %v151
    %v153 = vsel %vm134, %v152, %v148
    %v158 = vlaneseq
    %v159 = vshrl.u32 %v158, 7
    %v160 = vsub.s32 %v117, %v159
    %v161 = vrot.slane %v106, %v160
    %v162 = vlaneseq
    %v163 = vshrl.u32 %v162, 7
    %v164 = vsub.s32 %v122, %v163
    %v165 = vrot.slane %v109, %v164
    %v166 = vsel %vm127, %v165, %v161
    %v167 = vlaneseq
    %v168 = vshrl.u32 %v167, 7
    %v169 = vsub.s32 %v129, %v168
    %v170 = vrot.slane %v112, %v169
    %v171 = vsel %vm134, %v170, %v166
    %vm173 = vcmask 1040384
    %v174 = vsel %vm173, %v135, %v153
    %vm175 = vcmask 1041408
    %v176 = vsel %vm175, %v174, %v171
    %vm177 = vcmask 141312
    %178 = vst.msk [vmem:[%s2] sm:$0x7] %vm177, %v176
    // Predicated region
    $region14: #{tpu_custom_call.1} parent=1 // pred_check
      _
    $region15: #{tpu_custom_call.1} parent=1 // pred_check_branch
      %180 = sbr.rel (0) target = $region17
    $region16: #{tpu_custom_call.1} parent=1 // pred_region
      _
    $region17: #{tpu_custom_call.1} parent=1 // pred_fallthru
      _
    // Predicated region
    $region18: #{tpu_custom_call.1} parent=1 // pred_check
      _
    $region19: #{tpu_custom_call.1} parent=1 // pred_check_branch
      %182 = sbr.rel (0) target = $region21
    $region20: #{tpu_custom_call.1} parent=1 // pred_region
      _
    $region21: #{tpu_custom_call.1} parent=1 // pred_fallthru
      _
    %183 = vsyncpa [#allocation3], 1

</llo_original>
